<compile_context>
chip_gen: v6e
topology: v6e:2x2x1
jax: 0.10.0
libtpu: 0.0.40
codegen_flags: <defaults>
</compile_context>

<pallas_src>
import functools

import jax
import jax.numpy as jnp
from jax.experimental import pallas as pl
from jax.experimental.pallas import tpu as pltpu


def _text_cls_kernel(ids_ref, emb_ref, w_ref, b_ref, out_ref, pool_ref, *, tb, seq_len):
    """One grid step == one tile of `tb` bags.

    ids_ref : (B_pad * L,) int32, SMEM (scalar prefetch), pre-clamped to [0, V)
    emb_ref : (V, D_pad)  float32, VMEM-resident (constant index_map)
    w_ref   : (D_pad, C_pad) float32, VMEM-resident
    b_ref   : (1, C_pad)  float32, VMEM-resident
    out_ref : (tb, C_pad) float32 output block for this bag tile
    pool_ref: (tb, D_pad) float32 scratch (per-bag mean embeddings)
    """
    tile = pl.program_id(0)
    inv_len = jnp.float32(1.0 / seq_len)
    tile_base = tile * (tb * seq_len)

    # Gather + mean-pool: dynamic sublane slices of the VMEM-resident table,
    # accumulated per bag (no HBM DMA, no per-row semaphores).
    for i in range(tb):
        base = tile_base + i * seq_len
        acc = emb_ref[pl.ds(ids_ref[base], 1), :]
        for t in range(1, seq_len):
            acc = acc + emb_ref[pl.ds(ids_ref[base + t], 1), :]
        pool_ref[pl.ds(i, 1), :] = acc * inv_len

    # Linear: one (tb, D_pad) x (D_pad, C_pad) MXU matmul for the whole bag tile,
    # written as an unmasked lane-dense (tb, C_pad) store.
    out_ref[...] = (
        jnp.dot(pool_ref[...], w_ref[...], preferred_element_type=jnp.float32)
        + b_ref[...]
    )


def text_classification_forward(text, emb_weight, fc_weight, fc_bias):
    """text: (B, L) int ids; emb_weight: (V, D); fc_weight: (C, D) torch layout; fc_bias: (C,)."""
    B, L = text.shape
    V, D = emb_weight.shape
    C = fc_weight.shape[0]

    D_pad = pl.cdiv(D, 128) * 128
    C_pad = pl.cdiv(C, 128) * 128
    TB = min(128, pl.cdiv(B, 8) * 8)          # bags per grid step (multiple of 8)
    B_pad = pl.cdiv(B, TB) * TB

    # Hoisted OOB clamp + flat 1-D ids (tight SMEM padding); padded bags use id 0.
    ids = jnp.clip(text.astype(jnp.int32), 0, V - 1)
    ids_flat = jnp.zeros((B_pad, L), jnp.int32).at[:B, :].set(ids).reshape(-1)

    # Lane-dense (zero-padded) weights; padded dims contribute exactly zero.
    emb_pad = jnp.zeros((V, D_pad), jnp.float32).at[:, :D].set(emb_weight.astype(jnp.float32))
    w_pad = jnp.zeros((D_pad, C_pad), jnp.float32).at[:D, :C].set(fc_weight.T.astype(jnp.float32))
    b_pad = jnp.zeros((1, C_pad), jnp.float32).at[0, :C].set(fc_bias.astype(jnp.float32))

    kernel = functools.partial(_text_cls_kernel, tb=TB, seq_len=L)

    out = pl.pallas_call(
        kernel,
        out_shape=jax.ShapeDtypeStruct((B_pad, C_pad), jnp.float32),
        grid_spec=pltpu.PrefetchScalarGridSpec(
            num_scalar_prefetch=1,            # ids -> SMEM; also passed to every index_map
            grid=(B_pad // TB,),
            in_specs=[
                pl.BlockSpec((V, D_pad), lambda i, ids: (0, 0)),      # emb table (VMEM resident)
                pl.BlockSpec((D_pad, C_pad), lambda i, ids: (0, 0)),  # fc weight (VMEM resident)
                pl.BlockSpec((1, C_pad), lambda i, ids: (0, 0)),      # fc bias   (VMEM resident)
            ],
            out_specs=pl.BlockSpec((TB, C_pad), lambda i, ids: (i, 0)),
            scratch_shapes=[
                pltpu.VMEM((TB, D_pad), jnp.float32),  # pooled per-bag means for one tile
            ],
        ),
        compiler_params=pltpu.CompilerParams(
            dimension_semantics=("parallel",),  # bag tiles shard across TCs (v7x megacore)
            vmem_limit_bytes=32 * 1024 * 1024,
        ),
    )(ids_flat, emb_pad, w_pad, b_pad)
    return out[:B, :C]


def _reference_forward(text, emb_weight, fc_weight, fc_bias):
    """Plain-JAX reference matching PyTorch EmbeddingBag(mode='mean') + Linear."""
    embedded = jnp.mean(emb_weight[text], axis=1)  # (B, D)
    return embedded @ fc_weight.T + fc_bias        # (B, C)


if __name__ == "__main__":
    # Small, module-consistent shapes.
    vocab_size, embed_dim, num_class = 32, 32, 8
    batch, seq = 2, 8
    initrange = 0.5

    key = jax.random.PRNGKey(0)
    k_emb, k_fc, k_text = jax.random.split(key, 3)

    # Deterministic init mirroring init_weights(): uniform(-0.5, 0.5), bias zero.
    emb_weight = jax.random.uniform(
        k_emb, (vocab_size, embed_dim), jnp.float32, -initrange, initrange
    )
    fc_weight = jax.random.uniform(
        k_fc, (num_class, embed_dim), jnp.float32, -initrange, initrange
    )
    fc_bias = jnp.zeros((num_class,), jnp.float32)

    text = jax.random.randint(k_text, (batch, seq), 0, vocab_size, jnp.int32)

    out = text_classification_forward(text, emb_weight, fc_weight, fc_bias)
    out = jax.block_until_ready(out)

    ref = _reference_forward(text, emb_weight, fc_weight, fc_bias)
    assert out.shape == (batch, num_class)
    assert jnp.allclose(out, ref, atol=1e-5, rtol=1e-5), "mismatch vs reference"

    print("KERNEL_OK")
</pallas_src>

<mosaic_0001>
module attributes {stable_mosaic.version = 11 : i64} {
  func.func @_text_cls_kernel(%arg0: i32, %arg1: memref<64xi32, #tpu.memory_space<smem>>, %arg2: memref<32x128xf32, #tpu.memory_space<vmem>>, %arg3: memref<128x128xf32, #tpu.memory_space<vmem>>, %arg4: memref<1x128xf32, #tpu.memory_space<vmem>>, %arg5: memref<8x128xf32, #tpu.memory_space<vmem>>, %arg6: memref<8x128xf32, #tpu.memory_space<vmem>>) attributes {dimension_semantics = [#tpu.dimension_semantics<parallel>], iteration_bounds = array<i64: 1>, scalar_prefetch = 1 : i64, scratch_operands = 1 : i64, tpu.core_type = #tpu.core_type<tc>, window_params = [{pipeline_mode = #tpu.pipeline_mode<synchronous>, transform_indices = @transform_0, window_bounds = array<i64: 32, 128>}, {pipeline_mode = #tpu.pipeline_mode<synchronous>, transform_indices = @transform_1, window_bounds = array<i64: 128, 128>}, {pipeline_mode = #tpu.pipeline_mode<synchronous>, transform_indices = @transform_2, window_bounds = array<i64: 1, 128>}, {transform_indices = @transform_3, window_bounds = array<i64: 8, 128>}]} {
    %c64_i32 = arith.constant 64 : i32
    %0 = arith.muli %arg0, %c64_i32 : i32
    %c0_i32 = arith.constant 0 : i32
    %1 = arith.addi %0, %c0_i32 : i32
    %2 = arith.index_cast %1 : i32 to index
    %3 = memref.load %arg1[%2] : memref<64xi32, #tpu.memory_space<smem>>
    %4 = arith.index_cast %3 : i32 to index
    %c0 = arith.constant 0 : index
    %5 = vector.load %arg2[%4, %c0] : memref<32x128xf32, #tpu.memory_space<vmem>>, vector<1x128xf32>
    %c1_i32 = arith.constant 1 : i32
    %6 = arith.addi %1, %c1_i32 : i32
    %7 = arith.index_cast %6 : i32 to index
    %8 = memref.load %arg1[%7] : memref<64xi32, #tpu.memory_space<smem>>
    %9 = arith.index_cast %8 : i32 to index
    %c0_0 = arith.constant 0 : index
    %10 = vector.load %arg2[%9, %c0_0] : memref<32x128xf32, #tpu.memory_space<vmem>>, vector<1x128xf32>
    %11 = arith.addf %5, %10 : vector<1x128xf32>
    %c2_i32 = arith.constant 2 : i32
    %12 = arith.addi %1, %c2_i32 : i32
    %13 = arith.index_cast %12 : i32 to index
    %14 = memref.load %arg1[%13] : memref<64xi32, #tpu.memory_space<smem>>
    %15 = arith.index_cast %14 : i32 to index
    %c0_1 = arith.constant 0 : index
    %16 = vector.load %arg2[%15, %c0_1] : memref<32x128xf32, #tpu.memory_space<vmem>>, vector<1x128xf32>
    %17 = arith.addf %11, %16 : vector<1x128xf32>
    %c3_i32 = arith.constant 3 : i32
    %18 = arith.addi %1, %c3_i32 : i32
    %19 = arith.index_cast %18 : i32 to index
    %20 = memref.load %arg1[%19] : memref<64xi32, #tpu.memory_space<smem>>
    %21 = arith.index_cast %20 : i32 to index
    %c0_2 = arith.constant 0 : index
    %22 = vector.load %arg2[%21, %c0_2] : memref<32x128xf32, #tpu.memory_space<vmem>>, vector<1x128xf32>
    %23 = arith.addf %17, %22 : vector<1x128xf32>
    %c4_i32 = arith.constant 4 : i32
    %24 = arith.addi %1, %c4_i32 : i32
    %25 = arith.index_cast %24 : i32 to index
    %26 = memref.load %arg1[%25] : memref<64xi32, #tpu.memory_space<smem>>
    %27 = arith.index_cast %26 : i32 to index
    %c0_3 = arith.constant 0 : index
    %28 = vector.load %arg2[%27, %c0_3] : memref<32x128xf32, #tpu.memory_space<vmem>>, vector<1x128xf32>
    %29 = arith.addf %23, %28 : vector<1x128xf32>
    %c5_i32 = arith.constant 5 : i32
    %30 = arith.addi %1, %c5_i32 : i32
    %31 = arith.index_cast %30 : i32 to index
    %32 = memref.load %arg1[%31] : memref<64xi32, #tpu.memory_space<smem>>
    %33 = arith.index_cast %32 : i32 to index
    %c0_4 = arith.constant 0 : index
    %34 = vector.load %arg2[%33, %c0_4] : memref<32x128xf32, #tpu.memory_space<vmem>>, vector<1x128xf32>
    %35 = arith.addf %29, %34 : vector<1x128xf32>
    %c6_i32 = arith.constant 6 : i32
    %36 = arith.addi %1, %c6_i32 : i32
    %37 = arith.index_cast %36 : i32 to index
    %38 = memref.load %arg1[%37] : memref<64xi32, #tpu.memory_space<smem>>
    %39 = arith.index_cast %38 : i32 to index
    %c0_5 = arith.constant 0 : index
    %40 = vector.load %arg2[%39, %c0_5] : memref<32x128xf32, #tpu.memory_space<vmem>>, vector<1x128xf32>
    %41 = arith.addf %35, %40 : vector<1x128xf32>
    %c7_i32 = arith.constant 7 : i32
    %42 = arith.addi %1, %c7_i32 : i32
    %43 = arith.index_cast %42 : i32 to index
    %44 = memref.load %arg1[%43] : memref<64xi32, #tpu.memory_space<smem>>
    %45 = arith.index_cast %44 : i32 to index
    %c0_6 = arith.constant 0 : index
    %46 = vector.load %arg2[%45, %c0_6] : memref<32x128xf32, #tpu.memory_space<vmem>>, vector<1x128xf32>
    %47 = arith.addf %41, %46 : vector<1x128xf32>
    %cst = arith.constant 1.250000e-01 : f32
    %48 = vector.broadcast %cst : f32 to vector<1x128xf32>
    %49 = arith.mulf %47, %48 : vector<1x128xf32>
    %c0_7 = arith.constant 0 : index
    %c0_8 = arith.constant 0 : index
    %50 = vector.load %arg6[%c0_7, %c0_8] : memref<8x128xf32, #tpu.memory_space<vmem>>, vector<1x128xf32>
    tpu.vector_store %arg6[%c0_7, %c0_8], %49 {strides = array<i32>} : memref<8x128xf32, #tpu.memory_space<vmem>>, vector<1x128xf32>,
    %c8_i32 = arith.constant 8 : i32
    %51 = arith.addi %0, %c8_i32 : i32
    %52 = arith.index_cast %51 : i32 to index
    %53 = memref.load %arg1[%52] : memref<64xi32, #tpu.memory_space<smem>>
    %54 = arith.index_cast %53 : i32 to index
    %c0_9 = arith.constant 0 : index
    %55 = vector.load %arg2[%54, %c0_9] : memref<32x128xf32, #tpu.memory_space<vmem>>, vector<1x128xf32>
    %c1_i32_10 = arith.constant 1 : i32
    %56 = arith.addi %51, %c1_i32_10 : i32
    %57 = arith.index_cast %56 : i32 to index
    %58 = memref.load %arg1[%57] : memref<64xi32, #tpu.memory_space<smem>>
    %59 = arith.index_cast %58 : i32 to index
    %c0_11 = arith.constant 0 : index
    %60 = vector.load %arg2[%59, %c0_11] : memref<32x128xf32, #tpu.memory_space<vmem>>, vector<1x128xf32>
    %61 = arith.addf %55, %60 : vector<1x128xf32>
    %c2_i32_12 = arith.constant 2 : i32
    %62 = arith.addi %51, %c2_i32_12 : i32
    %63 = arith.index_cast %62 : i32 to index
    %64 = memref.load %arg1[%63] : memref<64xi32, #tpu.memory_space<smem>>
    %65 = arith.index_cast %64 : i32 to index
    %c0_13 = arith.constant 0 : index
    %66 = vector.load %arg2[%65, %c0_13] : memref<32x128xf32, #tpu.memory_space<vmem>>, vector<1x128xf32>
    %67 = arith.addf %61, %66 : vector<1x128xf32>
    %c3_i32_14 = arith.constant 3 : i32
    %68 = arith.addi %51, %c3_i32_14 : i32
    %69 = arith.index_cast %68 : i32 to index
    %70 = memref.load %arg1[%69] : memref<64xi32, #tpu.memory_space<smem>>
    %71 = arith.index_cast %70 : i32 to index
    %c0_15 = arith.constant 0 : index
    %72 = vector.load %arg2[%71, %c0_15] : memref<32x128xf32, #tpu.memory_space<vmem>>, vector<1x128xf32>
    %73 = arith.addf %67, %72 : vector<1x128xf32>
    %c4_i32_16 = arith.constant 4 : i32
    %74 = arith.addi %51, %c4_i32_16 : i32
    %75 = arith.index_cast %74 : i32 to index
    %76 = memref.load %arg1[%75] : memref<64xi32, #tpu.memory_space<smem>>
    %77 = arith.index_cast %76 : i32 to index
    %c0_17 = arith.constant 0 : index
    %78 = vector.load %arg2[%77, %c0_17] : memref<32x128xf32, #tpu.memory_space<vmem>>, vector<1x128xf32>
    %79 = arith.addf %73, %78 : vector<1x128xf32>
    %c5_i32_18 = arith.constant 5 : i32
    %80 = arith.addi %51, %c5_i32_18 : i32
    %81 = arith.index_cast %80 : i32 to index
    %82 = memref.load %arg1[%81] : memref<64xi32, #tpu.memory_space<smem>>
    %83 = arith.index_cast %82 : i32 to index
    %c0_19 = arith.constant 0 : index
    %84 = vector.load %arg2[%83, %c0_19] : memref<32x128xf32, #tpu.memory_space<vmem>>, vector<1x128xf32>
    %85 = arith.addf %79, %84 : vector<1x128xf32>
    %c6_i32_20 = arith.constant 6 : i32
    %86 = arith.addi %51, %c6_i32_20 : i32
    %87 = arith.index_cast %86 : i32 to index
    %88 = memref.load %arg1[%87] : memref<64xi32, #tpu.memory_space<smem>>
    %89 = arith.index_cast %88 : i32 to index
    %c0_21 = arith.constant 0 : index
    %90 = vector.load %arg2[%89, %c0_21] : memref<32x128xf32, #tpu.memory_space<vmem>>, vector<1x128xf32>
    %91 = arith.addf %85, %90 : vector<1x128xf32>
    %c7_i32_22 = arith.constant 7 : i32
    %92 = arith.addi %51, %c7_i32_22 : i32
    %93 = arith.index_cast %92 : i32 to index
    %94 = memref.load %arg1[%93] : memref<64xi32, #tpu.memory_space<smem>>
    %95 = arith.index_cast %94 : i32 to index
    %c0_23 = arith.constant 0 : index
    %96 = vector.load %arg2[%95, %c0_23] : memref<32x128xf32, #tpu.memory_space<vmem>>, vector<1x128xf32>
    %97 = arith.addf %91, %96 : vector<1x128xf32>
    %cst_24 = arith.constant 1.250000e-01 : f32
    %98 = vector.broadcast %cst_24 : f32 to vector<1x128xf32>
    %99 = arith.mulf %97, %98 : vector<1x128xf32>
    %c1 = arith.constant 1 : index
    %c0_25 = arith.constant 0 : index
    %100 = vector.load %arg6[%c1, %c0_25] : memref<8x128xf32, #tpu.memory_space<vmem>>, vector<1x128xf32>
    tpu.vector_store %arg6[%c1, %c0_25], %99 {strides = array<i32>} : memref<8x128xf32, #tpu.memory_space<vmem>>, vector<1x128xf32>,
    %c16_i32 = arith.constant 16 : i32
    %101 = arith.addi %0, %c16_i32 : i32
    %102 = arith.index_cast %101 : i32 to index
    %103 = memref.load %arg1[%102] : memref<64xi32, #tpu.memory_space<smem>>
    %104 = arith.index_cast %103 : i32 to index
    %c0_26 = arith.constant 0 : index
    %105 = vector.load %arg2[%104, %c0_26] : memref<32x128xf32, #tpu.memory_space<vmem>>, vector<1x128xf32>
    %c1_i32_27 = arith.constant 1 : i32
    %106 = arith.addi %101, %c1_i32_27 : i32
    %107 = arith.index_cast %106 : i32 to index
    %108 = memref.load %arg1[%107] : memref<64xi32, #tpu.memory_space<smem>>
    %109 = arith.index_cast %108 : i32 to index
    %c0_28 = arith.constant 0 : index
    %110 = vector.load %arg2[%109, %c0_28] : memref<32x128xf32, #tpu.memory_space<vmem>>, vector<1x128xf32>
    %111 = arith.addf %105, %110 : vector<1x128xf32>
    %c2_i32_29 = arith.constant 2 : i32
    %112 = arith.addi %101, %c2_i32_29 : i32
    %113 = arith.index_cast %112 : i32 to index
    %114 = memref.load %arg1[%113] : memref<64xi32, #tpu.memory_space<smem>>
    %115 = arith.index_cast %114 : i32 to index
    %c0_30 = arith.constant 0 : index
    %116 = vector.load %arg2[%115, %c0_30] : memref<32x128xf32, #tpu.memory_space<vmem>>, vector<1x128xf32>
    %117 = arith.addf %111, %116 : vector<1x128xf32>
    %c3_i32_31 = arith.constant 3 : i32
    %118 = arith.addi %101, %c3_i32_31 : i32
    %119 = arith.index_cast %118 : i32 to index
    %120 = memref.load %arg1[%119] : memref<64xi32, #tpu.memory_space<smem>>
    %121 = arith.index_cast %120 : i32 to index
    %c0_32 = arith.constant 0 : index
    %122 = vector.load %arg2[%121, %c0_32] : memref<32x128xf32, #tpu.memory_space<vmem>>, vector<1x128xf32>
    %123 = arith.addf %117, %122 : vector<1x128xf32>
    %c4_i32_33 = arith.constant 4 : i32
    %124 = arith.addi %101, %c4_i32_33 : i32
    %125 = arith.index_cast %124 : i32 to index
    %126 = memref.load %arg1[%125] : memref<64xi32, #tpu.memory_space<smem>>
    %127 = arith.index_cast %126 : i32 to index
    %c0_34 = arith.constant 0 : index
    %128 = vector.load %arg2[%127, %c0_34] : memref<32x128xf32, #tpu.memory_space<vmem>>, vector<1x128xf32>
    %129 = arith.addf %123, %128 : vector<1x128xf32>
    %c5_i32_35 = arith.constant 5 : i32
    %130 = arith.addi %101, %c5_i32_35 : i32
    %131 = arith.index_cast %130 : i32 to index
    %132 = memref.load %arg1[%131] : memref<64xi32, #tpu.memory_space<smem>>
    %133 = arith.index_cast %132 : i32 to index
    %c0_36 = arith.constant 0 : index
    %134 = vector.load %arg2[%133, %c0_36] : memref<32x128xf32, #tpu.memory_space<vmem>>, vector<1x128xf32>
    %135 = arith.addf %129, %134 : vector<1x128xf32>
    %c6_i32_37 = arith.constant 6 : i32
    %136 = arith.addi %101, %c6_i32_37 : i32
    %137 = arith.index_cast %136 : i32 to index
    %138 = memref.load %arg1[%137] : memref<64xi32, #tpu.memory_space<smem>>
    %139 = arith.index_cast %138 : i32 to index
    %c0_38 = arith.constant 0 : index
    %140 = vector.load %arg2[%139, %c0_38] : memref<32x128xf32, #tpu.memory_space<vmem>>, vector<1x128xf32>
    %141 = arith.addf %135, %140 : vector<1x128xf32>
    %c7_i32_39 = arith.constant 7 : i32
    %142 = arith.addi %101, %c7_i32_39 : i32
    %143 = arith.index_cast %142 : i32 to index
    %144 = memref.load %arg1[%143] : memref<64xi32, #tpu.memory_space<smem>>
    %145 = arith.index_cast %144 : i32 to index
    %c0_40 = arith.constant 0 : index
    %146 = vector.load %arg2[%145, %c0_40] : memref<32x128xf32, #tpu.memory_space<vmem>>, vector<1x128xf32>
    %147 = arith.addf %141, %146 : vector<1x128xf32>
    %cst_41 = arith.constant 1.250000e-01 : f32
    %148 = vector.broadcast %cst_41 : f32 to vector<1x128xf32>
    %149 = arith.mulf %147, %148 : vector<1x128xf32>
    %c2 = arith.constant 2 : index
    %c0_42 = arith.constant 0 : index
    %150 = vector.load %arg6[%c2, %c0_42] : memref<8x128xf32, #tpu.memory_space<vmem>>, vector<1x128xf32>
    tpu.vector_store %arg6[%c2, %c0_42], %149 {strides = array<i32>} : memref<8x128xf32, #tpu.memory_space<vmem>>, vector<1x128xf32>,
    %c24_i32 = arith.constant 24 : i32
    %151 = arith.addi %0, %c24_i32 : i32
    %152 = arith.index_cast %151 : i32 to index
    %153 = memref.load %arg1[%152] : memref<64xi32, #tpu.memory_space<smem>>
    %154 = arith.index_cast %153 : i32 to index
    %c0_43 = arith.constant 0 : index
    %155 = vector.load %arg2[%154, %c0_43] : memref<32x128xf32, #tpu.memory_space<vmem>>, vector<1x128xf32>
    %c1_i32_44 = arith.constant 1 : i32
    %156 = arith.addi %151, %c1_i32_44 : i32
    %157 = arith.index_cast %156 : i32 to index
    %158 = memref.load %arg1[%157] : memref<64xi32, #tpu.memory_space<smem>>
    %159 = arith.index_cast %158 : i32 to index
    %c0_45 = arith.constant 0 : index
    %160 = vector.load %arg2[%159, %c0_45] : memref<32x128xf32, #tpu.memory_space<vmem>>, vector<1x128xf32>
    %161 = arith.addf %155, %160 : vector<1x128xf32>
    %c2_i32_46 = arith.constant 2 : i32
    %162 = arith.addi %151, %c2_i32_46 : i32
    %163 = arith.index_cast %162 : i32 to index
    %164 = memref.load %arg1[%163] : memref<64xi32, #tpu.memory_space<smem>>
    %165 = arith.index_cast %164 : i32 to index
    %c0_47 = arith.constant 0 : index
    %166 = vector.load %arg2[%165, %c0_47] : memref<32x128xf32, #tpu.memory_space<vmem>>, vector<1x128xf32>
    %167 = arith.addf %161, %166 : vector<1x128xf32>
    %c3_i32_48 = arith.constant 3 : i32
    %168 = arith.addi %151, %c3_i32_48 : i32
    %169 = arith.index_cast %168 : i32 to index
    %170 = memref.load %arg1[%169] : memref<64xi32, #tpu.memory_space<smem>>
    %171 = arith.index_cast %170 : i32 to index
    %c0_49 = arith.constant 0 : index
    %172 = vector.load %arg2[%171, %c0_49] : memref<32x128xf32, #tpu.memory_space<vmem>>, vector<1x128xf32>
    %173 = arith.addf %167, %172 : vector<1x128xf32>
    %c4_i32_50 = arith.constant 4 : i32
    %174 = arith.addi %151, %c4_i32_50 : i32
    %175 = arith.index_cast %174 : i32 to index
    %176 = memref.load %arg1[%175] : memref<64xi32, #tpu.memory_space<smem>>
    %177 = arith.index_cast %176 : i32 to index
    %c0_51 = arith.constant 0 : index
    %178 = vector.load %arg2[%177, %c0_51] : memref<32x128xf32, #tpu.memory_space<vmem>>, vector<1x128xf32>
    %179 = arith.addf %173, %178 : vector<1x128xf32>
    %c5_i32_52 = arith.constant 5 : i32
    %180 = arith.addi %151, %c5_i32_52 : i32
    %181 = arith.index_cast %180 : i32 to index
    %182 = memref.load %arg1[%181] : memref<64xi32, #tpu.memory_space<smem>>
    %183 = arith.index_cast %182 : i32 to index
    %c0_53 = arith.constant 0 : index
    %184 = vector.load %arg2[%183, %c0_53] : memref<32x128xf32, #tpu.memory_space<vmem>>, vector<1x128xf32>
    %185 = arith.addf %179, %184 : vector<1x128xf32>
    %c6_i32_54 = arith.constant 6 : i32
    %186 = arith.addi %151, %c6_i32_54 : i32
    %187 = arith.index_cast %186 : i32 to index
    %188 = memref.load %arg1[%187] : memref<64xi32, #tpu.memory_space<smem>>
    %189 = arith.index_cast %188 : i32 to index
    %c0_55 = arith.constant 0 : index
    %190 = vector.load %arg2[%189, %c0_55] : memref<32x128xf32, #tpu.memory_space<vmem>>, vector<1x128xf32>
    %191 = arith.addf %185, %190 : vector<1x128xf32>
    %c7_i32_56 = arith.constant 7 : i32
    %192 = arith.addi %151, %c7_i32_56 : i32
    %193 = arith.index_cast %192 : i32 to index
    %194 = memref.load %arg1[%193] : memref<64xi32, #tpu.memory_space<smem>>
    %195 = arith.index_cast %194 : i32 to index
    %c0_57 = arith.constant 0 : index
    %196 = vector.load %arg2[%195, %c0_57] : memref<32x128xf32, #tpu.memory_space<vmem>>, vector<1x128xf32>
    %197 = arith.addf %191, %196 : vector<1x128xf32>
    %cst_58 = arith.constant 1.250000e-01 : f32
    %198 = vector.broadcast %cst_58 : f32 to vector<1x128xf32>
    %199 = arith.mulf %197, %198 : vector<1x128xf32>
    %c3 = arith.constant 3 : index
    %c0_59 = arith.constant 0 : index
    %200 = vector.load %arg6[%c3, %c0_59] : memref<8x128xf32, #tpu.memory_space<vmem>>, vector<1x128xf32>
    tpu.vector_store %arg6[%c3, %c0_59], %199 {strides = array<i32>} : memref<8x128xf32, #tpu.memory_space<vmem>>, vector<1x128xf32>,
    %c32_i32 = arith.constant 32 : i32
    %201 = arith.addi %0, %c32_i32 : i32
    %202 = arith.index_cast %201 : i32 to index
    %203 = memref.load %arg1[%202] : memref<64xi32, #tpu.memory_space<smem>>
    %204 = arith.index_cast %203 : i32 to index
    %c0_60 = arith.constant 0 : index
    %205 = vector.load %arg2[%204, %c0_60] : memref<32x128xf32, #tpu.memory_space<vmem>>, vector<1x128xf32>
    %c1_i32_61 = arith.constant 1 : i32
    %206 = arith.addi %201, %c1_i32_61 : i32
    %207 = arith.index_cast %206 : i32 to index
    %208 = memref.load %arg1[%207] : memref<64xi32, #tpu.memory_space<smem>>
    %209 = arith.index_cast %208 : i32 to index
    %c0_62 = arith.constant 0 : index
    %210 = vector.load %arg2[%209, %c0_62] : memref<32x128xf32, #tpu.memory_space<vmem>>, vector<1x128xf32>
    %211 = arith.addf %205, %210 : vector<1x128xf32>
    %c2_i32_63 = arith.constant 2 : i32
    %212 = arith.addi %201, %c2_i32_63 : i32
    %213 = arith.index_cast %212 : i32 to index
    %214 = memref.load %arg1[%213] : memref<64xi32, #tpu.memory_space<smem>>
    %215 = arith.index_cast %214 : i32 to index
    %c0_64 = arith.constant 0 : index
    %216 = vector.load %arg2[%215, %c0_64] : memref<32x128xf32, #tpu.memory_space<vmem>>, vector<1x128xf32>
    %217 = arith.addf %211, %216 : vector<1x128xf32>
    %c3_i32_65 = arith.constant 3 : i32
    %218 = arith.addi %201, %c3_i32_65 : i32
    %219 = arith.index_cast %218 : i32 to index
    %220 = memref.load %arg1[%219] : memref<64xi32, #tpu.memory_space<smem>>
    %221 = arith.index_cast %220 : i32 to index
    %c0_66 = arith.constant 0 : index
    %222 = vector.load %arg2[%221, %c0_66] : memref<32x128xf32, #tpu.memory_space<vmem>>, vector<1x128xf32>
    %223 = arith.addf %217, %222 : vector<1x128xf32>
    %c4_i32_67 = arith.constant 4 : i32
    %224 = arith.addi %201, %c4_i32_67 : i32
    %225 = arith.index_cast %224 : i32 to index
    %226 = memref.load %arg1[%225] : memref<64xi32, #tpu.memory_space<smem>>
    %227 = arith.index_cast %226 : i32 to index
    %c0_68 = arith.constant 0 : index
    %228 = vector.load %arg2[%227, %c0_68] : memref<32x128xf32, #tpu.memory_space<vmem>>, vector<1x128xf32>
    %229 = arith.addf %223, %228 : vector<1x128xf32>
    %c5_i32_69 = arith.constant 5 : i32
    %230 = arith.addi %201, %c5_i32_69 : i32
    %231 = arith.index_cast %230 : i32 to index
    %232 = memref.load %arg1[%231] : memref<64xi32, #tpu.memory_space<smem>>
    %233 = arith.index_cast %232 : i32 to index
    %c0_70 = arith.constant 0 : index
    %234 = vector.load %arg2[%233, %c0_70] : memref<32x128xf32, #tpu.memory_space<vmem>>, vector<1x128xf32>
    %235 = arith.addf %229, %234 : vector<1x128xf32>
    %c6_i32_71 = arith.constant 6 : i32
    %236 = arith.addi %201, %c6_i32_71 : i32
    %237 = arith.index_cast %236 : i32 to index
    %238 = memref.load %arg1[%237] : memref<64xi32, #tpu.memory_space<smem>>
    %239 = arith.index_cast %238 : i32 to index
    %c0_72 = arith.constant 0 : index
    %240 = vector.load %arg2[%239, %c0_72] : memref<32x128xf32, #tpu.memory_space<vmem>>, vector<1x128xf32>
    %241 = arith.addf %235, %240 : vector<1x128xf32>
    %c7_i32_73 = arith.constant 7 : i32
    %242 = arith.addi %201, %c7_i32_73 : i32
    %243 = arith.index_cast %242 : i32 to index
    %244 = memref.load %arg1[%243] : memref<64xi32, #tpu.memory_space<smem>>
    %245 = arith.index_cast %244 : i32 to index
    %c0_74 = arith.constant 0 : index
    %246 = vector.load %arg2[%245, %c0_74] : memref<32x128xf32, #tpu.memory_space<vmem>>, vector<1x128xf32>
    %247 = arith.addf %241, %246 : vector<1x128xf32>
    %cst_75 = arith.constant 1.250000e-01 : f32
    %248 = vector.broadcast %cst_75 : f32 to vector<1x128xf32>
    %249 = arith.mulf %247, %248 : vector<1x128xf32>
    %c4 = arith.constant 4 : index
    %c0_76 = arith.constant 0 : index
    %250 = vector.load %arg6[%c4, %c0_76] : memref<8x128xf32, #tpu.memory_space<vmem>>, vector<1x128xf32>
    tpu.vector_store %arg6[%c4, %c0_76], %249 {strides = array<i32>} : memref<8x128xf32, #tpu.memory_space<vmem>>, vector<1x128xf32>,
    %c40_i32 = arith.constant 40 : i32
    %251 = arith.addi %0, %c40_i32 : i32
    %252 = arith.index_cast %251 : i32 to index
    %253 = memref.load %arg1[%252] : memref<64xi32, #tpu.memory_space<smem>>
    %254 = arith.index_cast %253 : i32 to index
    %c0_77 = arith.constant 0 : index
    %255 = vector.load %arg2[%254, %c0_77] : memref<32x128xf32, #tpu.memory_space<vmem>>, vector<1x128xf32>
    %c1_i32_78 = arith.constant 1 : i32
    %256 = arith.addi %251, %c1_i32_78 : i32
    %257 = arith.index_cast %256 : i32 to index
    %258 = memref.load %arg1[%257] : memref<64xi32, #tpu.memory_space<smem>>
    %259 = arith.index_cast %258 : i32 to index
    %c0_79 = arith.constant 0 : index
    %260 = vector.load %arg2[%259, %c0_79] : memref<32x128xf32, #tpu.memory_space<vmem>>, vector<1x128xf32>
    %261 = arith.addf %255, %260 : vector<1x128xf32>
    %c2_i32_80 = arith.constant 2 : i32
    %262 = arith.addi %251, %c2_i32_80 : i32
    %263 = arith.index_cast %262 : i32 to index
    %264 = memref.load %arg1[%263] : memref<64xi32, #tpu.memory_space<smem>>
    %265 = arith.index_cast %264 : i32 to index
    %c0_81 = arith.constant 0 : index
    %266 = vector.load %arg2[%265, %c0_81] : memref<32x128xf32, #tpu.memory_space<vmem>>, vector<1x128xf32>
    %267 = arith.addf %261, %266 : vector<1x128xf32>
    %c3_i32_82 = arith.constant 3 : i32
    %268 = arith.addi %251, %c3_i32_82 : i32
    %269 = arith.index_cast %268 : i32 to index
    %270 = memref.load %arg1[%269] : memref<64xi32, #tpu.memory_space<smem>>
    %271 = arith.index_cast %270 : i32 to index
    %c0_83 = arith.constant 0 : index
    %272 = vector.load %arg2[%271, %c0_83] : memref<32x128xf32, #tpu.memory_space<vmem>>, vector<1x128xf32>
    %273 = arith.addf %267, %272 : vector<1x128xf32>
    %c4_i32_84 = arith.constant 4 : i32
    %274 = arith.addi %251, %c4_i32_84 : i32
    %275 = arith.index_cast %274 : i32 to index
    %276 = memref.load %arg1[%275] : memref<64xi32, #tpu.memory_space<smem>>
    %277 = arith.index_cast %276 : i32 to index
    %c0_85 = arith.constant 0 : index
    %278 = vector.load %arg2[%277, %c0_85] : memref<32x128xf32, #tpu.memory_space<vmem>>, vector<1x128xf32>
    %279 = arith.addf %273, %278 : vector<1x128xf32>
    %c5_i32_86 = arith.constant 5 : i32
    %280 = arith.addi %251, %c5_i32_86 : i32
    %281 = arith.index_cast %280 : i32 to index
    %282 = memref.load %arg1[%281] : memref<64xi32, #tpu.memory_space<smem>>
    %283 = arith.index_cast %282 : i32 to index
    %c0_87 = arith.constant 0 : index
    %284 = vector.load %arg2[%283, %c0_87] : memref<32x128xf32, #tpu.memory_space<vmem>>, vector<1x128xf32>
    %285 = arith.addf %279, %284 : vector<1x128xf32>
    %c6_i32_88 = arith.constant 6 : i32
    %286 = arith.addi %251, %c6_i32_88 : i32
    %287 = arith.index_cast %286 : i32 to index
    %288 = memref.load %arg1[%287] : memref<64xi32, #tpu.memory_space<smem>>
    %289 = arith.index_cast %288 : i32 to index
    %c0_89 = arith.constant 0 : index
    %290 = vector.load %arg2[%289, %c0_89] : memref<32x128xf32, #tpu.memory_space<vmem>>, vector<1x128xf32>
    %291 = arith.addf %285, %290 : vector<1x128xf32>
    %c7_i32_90 = arith.constant 7 : i32
    %292 = arith.addi %251, %c7_i32_90 : i32
    %293 = arith.index_cast %292 : i32 to index
    %294 = memref.load %arg1[%293] : memref<64xi32, #tpu.memory_space<smem>>
    %295 = arith.index_cast %294 : i32 to index
    %c0_91 = arith.constant 0 : index
    %296 = vector.load %arg2[%295, %c0_91] : memref<32x128xf32, #tpu.memory_space<vmem>>, vector<1x128xf32>
    %297 = arith.addf %291, %296 : vector<1x128xf32>
    %cst_92 = arith.constant 1.250000e-01 : f32
    %298 = vector.broadcast %cst_92 : f32 to vector<1x128xf32>
    %299 = arith.mulf %297, %298 : vector<1x128xf32>
    %c5 = arith.constant 5 : index
    %c0_93 = arith.constant 0 : index
    %300 = vector.load %arg6[%c5, %c0_93] : memref<8x128xf32, #tpu.memory_space<vmem>>, vector<1x128xf32>
    tpu.vector_store %arg6[%c5, %c0_93], %299 {strides = array<i32>} : memref<8x128xf32, #tpu.memory_space<vmem>>, vector<1x128xf32>,
    %c48_i32 = arith.constant 48 : i32
    %301 = arith.addi %0, %c48_i32 : i32
    %302 = arith.index_cast %301 : i32 to index
    %303 = memref.load %arg1[%302] : memref<64xi32, #tpu.memory_space<smem>>
    %304 = arith.index_cast %303 : i32 to index
    %c0_94 = arith.constant 0 : index
    %305 = vector.load %arg2[%304, %c0_94] : memref<32x128xf32, #tpu.memory_space<vmem>>, vector<1x128xf32>
    %c1_i32_95 = arith.constant 1 : i32
    %306 = arith.addi %301, %c1_i32_95 : i32
    %307 = arith.index_cast %306 : i32 to index
    %308 = memref.load %arg1[%307] : memref<64xi32, #tpu.memory_space<smem>>
    %309 = arith.index_cast %308 : i32 to index
    %c0_96 = arith.constant 0 : index
    %310 = vector.load %arg2[%309, %c0_96] : memref<32x128xf32, #tpu.memory_space<vmem>>, vector<1x128xf32>
    %311 = arith.addf %305, %310 : vector<1x128xf32>
    %c2_i32_97 = arith.constant 2 : i32
    %312 = arith.addi %301, %c2_i32_97 : i32
    %313 = arith.index_cast %312 : i32 to index
    %314 = memref.load %arg1[%313] : memref<64xi32, #tpu.memory_space<smem>>
    %315 = arith.index_cast %314 : i32 to index
    %c0_98 = arith.constant 0 : index
    %316 = vector.load %arg2[%315, %c0_98] : memref<32x128xf32, #tpu.memory_space<vmem>>, vector<1x128xf32>
    %317 = arith.addf %311, %316 : vector<1x128xf32>
    %c3_i32_99 = arith.constant 3 : i32
    %318 = arith.addi %301, %c3_i32_99 : i32
    %319 = arith.index_cast %318 : i32 to index
    %320 = memref.load %arg1[%319] : memref<64xi32, #tpu.memory_space<smem>>
    %321 = arith.index_cast %320 : i32 to index
    %c0_100 = arith.constant 0 : index
    %322 = vector.load %arg2[%321, %c0_100] : memref<32x128xf32, #tpu.memory_space<vmem>>, vector<1x128xf32>
    %323 = arith.addf %317, %322 : vector<1x128xf32>
    %c4_i32_101 = arith.constant 4 : i32
    %324 = arith.addi %301, %c4_i32_101 : i32
    %325 = arith.index_cast %324 : i32 to index
    %326 = memref.load %arg1[%325] : memref<64xi32, #tpu.memory_space<smem>>
    %327 = arith.index_cast %326 : i32 to index
    %c0_102 = arith.constant 0 : index
    %328 = vector.load %arg2[%327, %c0_102] : memref<32x128xf32, #tpu.memory_space<vmem>>, vector<1x128xf32>
    %329 = arith.addf %323, %328 : vector<1x128xf32>
    %c5_i32_103 = arith.constant 5 : i32
    %330 = arith.addi %301, %c5_i32_103 : i32
    %331 = arith.index_cast %330 : i32 to index
    %332 = memref.load %arg1[%331] : memref<64xi32, #tpu.memory_space<smem>>
    %333 = arith.index_cast %332 : i32 to index
    %c0_104 = arith.constant 0 : index
    %334 = vector.load %arg2[%333, %c0_104] : memref<32x128xf32, #tpu.memory_space<vmem>>, vector<1x128xf32>
    %335 = arith.addf %329, %334 : vector<1x128xf32>
    %c6_i32_105 = arith.constant 6 : i32
    %336 = arith.addi %301, %c6_i32_105 : i32
    %337 = arith.index_cast %336 : i32 to index
    %338 = memref.load %arg1[%337] : memref<64xi32, #tpu.memory_space<smem>>
    %339 = arith.index_cast %338 : i32 to index
    %c0_106 = arith.constant 0 : index
    %340 = vector.load %arg2[%339, %c0_106] : memref<32x128xf32, #tpu.memory_space<vmem>>, vector<1x128xf32>
    %341 = arith.addf %335, %340 : vector<1x128xf32>
    %c7_i32_107 = arith.constant 7 : i32
    %342 = arith.addi %301, %c7_i32_107 : i32
    %343 = arith.index_cast %342 : i32 to index
    %344 = memref.load %arg1[%343] : memref<64xi32, #tpu.memory_space<smem>>
    %345 = arith.index_cast %344 : i32 to index
    %c0_108 = arith.constant 0 : index
    %346 = vector.load %arg2[%345, %c0_108] : memref<32x128xf32, #tpu.memory_space<vmem>>, vector<1x128xf32>
    %347 = arith.addf %341, %346 : vector<1x128xf32>
    %cst_109 = arith.constant 1.250000e-01 : f32
    %348 = vector.broadcast %cst_109 : f32 to vector<1x128xf32>
    %349 = arith.mulf %347, %348 : vector<1x128xf32>
    %c6 = arith.constant 6 : index
    %c0_110 = arith.constant 0 : index
    %350 = vector.load %arg6[%c6, %c0_110] : memref<8x128xf32, #tpu.memory_space<vmem>>, vector<1x128xf32>
    tpu.vector_store %arg6[%c6, %c0_110], %349 {strides = array<i32>} : memref<8x128xf32, #tpu.memory_space<vmem>>, vector<1x128xf32>,
    %c56_i32 = arith.constant 56 : i32
    %351 = arith.addi %0, %c56_i32 : i32
    %352 = arith.index_cast %351 : i32 to index
    %353 = memref.load %arg1[%352] : memref<64xi32, #tpu.memory_space<smem>>
    %354 = arith.index_cast %353 : i32 to index
    %c0_111 = arith.constant 0 : index
    %355 = vector.load %arg2[%354, %c0_111] : memref<32x128xf32, #tpu.memory_space<vmem>>, vector<1x128xf32>
    %c1_i32_112 = arith.constant 1 : i32
    %356 = arith.addi %351, %c1_i32_112 : i32
    %357 = arith.index_cast %356 : i32 to index
    %358 = memref.load %arg1[%357] : memref<64xi32, #tpu.memory_space<smem>>
    %359 = arith.index_cast %358 : i32 to index
    %c0_113 = arith.constant 0 : index
    %360 = vector.load %arg2[%359, %c0_113] : memref<32x128xf32, #tpu.memory_space<vmem>>, vector<1x128xf32>
    %361 = arith.addf %355, %360 : vector<1x128xf32>
    %c2_i32_114 = arith.constant 2 : i32
    %362 = arith.addi %351, %c2_i32_114 : i32
    %363 = arith.index_cast %362 : i32 to index
    %364 = memref.load %arg1[%363] : memref<64xi32, #tpu.memory_space<smem>>
    %365 = arith.index_cast %364 : i32 to index
    %c0_115 = arith.constant 0 : index
    %366 = vector.load %arg2[%365, %c0_115] : memref<32x128xf32, #tpu.memory_space<vmem>>, vector<1x128xf32>
    %367 = arith.addf %361, %366 : vector<1x128xf32>
    %c3_i32_116 = arith.constant 3 : i32
    %368 = arith.addi %351, %c3_i32_116 : i32
    %369 = arith.index_cast %368 : i32 to index
    %370 = memref.load %arg1[%369] : memref<64xi32, #tpu.memory_space<smem>>
    %371 = arith.index_cast %370 : i32 to index
    %c0_117 = arith.constant 0 : index
    %372 = vector.load %arg2[%371, %c0_117] : memref<32x128xf32, #tpu.memory_space<vmem>>, vector<1x128xf32>
    %373 = arith.addf %367, %372 : vector<1x128xf32>
    %c4_i32_118 = arith.constant 4 : i32
    %374 = arith.addi %351, %c4_i32_118 : i32
    %375 = arith.index_cast %374 : i32 to index
    %376 = memref.load %arg1[%375] : memref<64xi32, #tpu.memory_space<smem>>
    %377 = arith.index_cast %376 : i32 to index
    %c0_119 = arith.constant 0 : index
    %378 = vector.load %arg2[%377, %c0_119] : memref<32x128xf32, #tpu.memory_space<vmem>>, vector<1x128xf32>
    %379 = arith.addf %373, %378 : vector<1x128xf32>
    %c5_i32_120 = arith.constant 5 : i32
    %380 = arith.addi %351, %c5_i32_120 : i32
    %381 = arith.index_cast %380 : i32 to index
    %382 = memref.load %arg1[%381] : memref<64xi32, #tpu.memory_space<smem>>
    %383 = arith.index_cast %382 : i32 to index
    %c0_121 = arith.constant 0 : index
    %384 = vector.load %arg2[%383, %c0_121] : memref<32x128xf32, #tpu.memory_space<vmem>>, vector<1x128xf32>
    %385 = arith.addf %379, %384 : vector<1x128xf32>
    %c6_i32_122 = arith.constant 6 : i32
    %386 = arith.addi %351, %c6_i32_122 : i32
    %387 = arith.index_cast %386 : i32 to index
    %388 = memref.load %arg1[%387] : memref<64xi32, #tpu.memory_space<smem>>
    %389 = arith.index_cast %388 : i32 to index
    %c0_123 = arith.constant 0 : index
    %390 = vector.load %arg2[%389, %c0_123] : memref<32x128xf32, #tpu.memory_space<vmem>>, vector<1x128xf32>
    %391 = arith.addf %385, %390 : vector<1x128xf32>
    %c7_i32_124 = arith.constant 7 : i32
    %392 = arith.addi %351, %c7_i32_124 : i32
    %393 = arith.index_cast %392 : i32 to index
    %394 = memref.load %arg1[%393] : memref<64xi32, #tpu.memory_space<smem>>
    %395 = arith.index_cast %394 : i32 to index
    %c0_125 = arith.constant 0 : index
    %396 = vector.load %arg2[%395, %c0_125] : memref<32x128xf32, #tpu.memory_space<vmem>>, vector<1x128xf32>
    %397 = arith.addf %391, %396 : vector<1x128xf32>
    %cst_126 = arith.constant 1.250000e-01 : f32
    %398 = vector.broadcast %cst_126 : f32 to vector<1x128xf32>
    %399 = arith.mulf %397, %398 : vector<1x128xf32>
    %c7 = arith.constant 7 : index
    %c0_127 = arith.constant 0 : index
    %400 = vector.load %arg6[%c7, %c0_127] : memref<8x128xf32, #tpu.memory_space<vmem>>, vector<1x128xf32>
    tpu.vector_store %arg6[%c7, %c0_127], %399 {strides = array<i32>} : memref<8x128xf32, #tpu.memory_space<vmem>>, vector<1x128xf32>,
    %c0_128 = arith.constant 0 : index
    %c0_129 = arith.constant 0 : index
    %401 = vector.load %arg6[%c0_128, %c0_129] : memref<8x128xf32, #tpu.memory_space<vmem>>, vector<8x128xf32>
    %c0_130 = arith.constant 0 : index
    %c0_131 = arith.constant 0 : index
    %402 = vector.load %arg3[%c0_130, %c0_131] : memref<128x128xf32, #tpu.memory_space<vmem>>, vector<128x128xf32>
    %cst_132 = arith.constant dense<0.000000e+00> : vector<8x128xf32>
    %403 = tpu.matmul %401, %402, %cst_132 {dimension_numbers = #tpu.dot_dimension_numbers<[1], [0], [0], [1], [0, 0, 1, 1], [], []>} : vector<8x128xf32>, vector<128x128xf32>, vector<8x128xf32> -> vector<8x128xf32>
    %c0_133 = arith.constant 0 : index
    %c0_134 = arith.constant 0 : index
    %404 = vector.load %arg4[%c0_133, %c0_134] : memref<1x128xf32, #tpu.memory_space<vmem>>, vector<1x128xf32>
    %405 = vector.broadcast %404 : vector<1x128xf32> to vector<8x128xf32>
    %406 = arith.addf %403, %405 : vector<8x128xf32>
    %c0_135 = arith.constant 0 : index
    %c0_136 = arith.constant 0 : index
    %407 = vector.load %arg5[%c0_135, %c0_136] : memref<8x128xf32, #tpu.memory_space<vmem>>, vector<8x128xf32>
    tpu.vector_store %arg5[%c0_135, %c0_136], %406 {strides = array<i32>} : memref<8x128xf32, #tpu.memory_space<vmem>>, vector<8x128xf32>,
    return
  }
  func.func @transform_0(%arg0: i32, %arg1: memref<64xi32, #tpu.memory_space<smem>>) -> (i32, i32) {
    %c0_i32 = arith.constant 0 : i32
    %c0_i32_0 = arith.constant 0 : i32
    %c0_i32_1 = arith.constant 0 : i32
    return %c0_i32, %c0_i32_0 : i32, i32
  }
  func.func @transform_1(%arg0: i32, %arg1: memref<64xi32, #tpu.memory_space<smem>>) -> (i32, i32) {
    %c0_i32 = arith.constant 0 : i32
    %c0_i32_0 = arith.constant 0 : i32
    %c0_i32_1 = arith.constant 0 : i32
    return %c0_i32, %c0_i32_0 : i32, i32
  }
  func.func @transform_2(%arg0: i32, %arg1: memref<64xi32, #tpu.memory_space<smem>>) -> (i32, i32) {
    %c0_i32 = arith.constant 0 : i32
    %c0_i32_0 = arith.constant 0 : i32
    %c0_i32_1 = arith.constant 0 : i32
    return %c0_i32, %c0_i32_0 : i32, i32
  }
  func.func @transform_3(%arg0: i32, %arg1: memref<64xi32, #tpu.memory_space<smem>>) -> (i32, i32) {
    %c0_i32 = arith.constant 0 : i32
    %c0_i32_0 = arith.constant 0 : i32
    return %arg0, %c0_i32 : i32, i32
  }
}

</mosaic_0001>

<llo_original>
// kernel: tpu_custom_call.1
$region0: #{tpu_custom_call.1}
  #allocation0 [shape = 'u32[]', space=smem, size = 0x4, offset = 0x4, fixed_abs, tag = 'smem constant byte address 0x4 - core index']
  #allocation1 [shape = 'u32[144,128]{1,0:T(1,128)}', space=vmem, size = 0x12000, scoped, tag = 'internal scratch']
  #allocation2 [shape = 'f32[8,128]{1,0:T(8,128)}', space=vmem, size = 0x1000, scoped, tag = 'scratch operand']
  #allocation3 [shape = 's32[1]{0}', space=sflag, size = 0x4, scoped, tag = 'scoped memory for tpu_custom_call.1']
  #allocation4 [shape = 'u8[512]{0}', space=smem, size = 0x200, scoped, tag = 'prefetched SMEM operand 0']
  %s0 = inlined_call_operand.hbm [shape: s32[64], index: 0, kind: input, shape index: {}]
  %s1 = inlined_call_operand.hbm [shape: f32[32,128], index: 1, kind: input, shape index: {}]
  %s2 = inlined_call_operand.hbm [shape: f32[128,128], index: 2, kind: input, shape index: {}]
  %s3 = inlined_call_operand.vmem [shape: f32[1,128], index: 3, kind: input, shape index: {}]
  %s4 = inlined_call_operand.hbm [shape: f32[8,128], index: 4, kind: output, shape index: {}]
  %s5 = sld [smem:[#allocation0]]
  $region30: #{tpu_custom_call.1} parent=0
    _
  %s7 = ssub.s32 1, %s5
  %s8 = scalar_select 0, %s7, %s5
  %10 = dma.hbm_to_smem %s0, 16, [#allocation4], [#allocation3]
  %11 = dma.done [#allocation3], 16
  %12 = sfence
  $region1: #{tpu_custom_call.1} parent=0
    #allocation5 [shape = 'u8[16384]{0}', space=vmem, size = 0x4000, scoped, tag = 'input window, operand 1, single buffered']
    #allocation6 [shape = 's32[1]{0}', space=sflag, size = 0x4, scoped, tag = 'scoped memory for tpu_custom_call.1']
    #allocation7 [shape = 's32[1]{0}', space=sflag, size = 0x4, scoped, tag = 'scoped memory for tpu_custom_call.1']
    #allocation8 [shape = 'u8[65536]{0}', space=vmem, size = 0x10000, scoped, tag = 'input window, operand 2, single buffered']
    #allocation9 [shape = 's32[1]{0}', space=sflag, size = 0x4, scoped, tag = 'scoped memory for tpu_custom_call.1']
    #allocation10 [shape = 'u8[4096]{0}', space=vmem, size = 0x1000, scoped, tag = 'output window, operand 0, single buffered']
    %13 = vsyncpa [#allocation6], 0
    %14 = vsyncpa [#allocation9], 0
    %15 = vsyncpa [#allocation7], 0
    // Predicated region
    $region2: #{tpu_custom_call.1} parent=1 // pred_check
      _
    $region3: #{tpu_custom_call.1} parent=1 // pred_check_branch
      %17 = sbr.rel (0) target = $region5
    $region4: #{tpu_custom_call.1} parent=1 // pred_region
      %s19 = ssub.s32 512, 512
      %20 = vsyncadd [#allocation6], %s19
      %s21 = sshll.u32 [#allocation5], 4
      %s22 = int_to_ptr.vmem [resolvable:$true] %s21
      %27 = dma.hbm_to_vmem [thread:$0]  %s1, 512, %s22, [#allocation6], 128, 128, 8
    $region5: #{tpu_custom_call.1} parent=1 // pred_fallthru
      _
    // Predicated region
    $region6: #{tpu_custom_call.1} parent=1 // pred_check
      _
    $region7: #{tpu_custom_call.1} parent=1 // pred_check_branch
      %29 = sbr.rel (0) target = $region9
    $region8: #{tpu_custom_call.1} parent=1 // pred_region
      %s31 = ssub.s32 2048, 2048
      %32 = vsyncadd [#allocation9], %s31
      %s33 = sshll.u32 [#allocation8], 4
      %s34 = int_to_ptr.vmem [resolvable:$true] %s33
      %39 = dma.hbm_to_vmem [thread:$0]  %s2, 2048, %s34, [#allocation9], 128, 128, 8
    $region9: #{tpu_custom_call.1} parent=1 // pred_fallthru
      _
    // Predicated region
    $region10: #{tpu_custom_call.1} parent=1 // pred_check
      _
    $region11: #{tpu_custom_call.1} parent=1 // pred_check_branch
      %41 = sbr.rel (0) target = $region13
    $region12: #{tpu_custom_call.1} parent=1 // pred_region
      _
    $region13: #{tpu_custom_call.1} parent=1 // pred_fallthru
      _
    // Predicated region
    $region14: #{tpu_custom_call.1} parent=1 // pred_check
      _
    $region15: #{tpu_custom_call.1} parent=1 // pred_check_branch
      %43 = sbr.rel (0) target = $region17
    $region16: #{tpu_custom_call.1} parent=1 // pred_region
      %44 = dma.done [#allocation6], 512
    $region17: #{tpu_custom_call.1} parent=1 // pred_fallthru
      _
    // Predicated region
    $region18: #{tpu_custom_call.1} parent=1 // pred_check
      _
    $region19: #{tpu_custom_call.1} parent=1 // pred_check_branch
      %46 = sbr.rel (0) target = $region21
    $region20: #{tpu_custom_call.1} parent=1 // pred_region
      %47 = dma.done [#allocation9], 2048
    $region21: #{tpu_custom_call.1} parent=1 // pred_fallthru
      _
    %s48 = smul.u32 0, 64
    %s49 = sld [smem:[#allocation4 + %s48]]
    %s50 = scalar_lea.vmem [#allocation5], %s49
    %v51 = vld [vmem:[%s50] sm:$0x1]
    %s52 = sadd.s32 %s48, 1
    %s53 = sld [smem:[#allocation4 + %s52]]
    %s54 = scalar_lea.vmem [#allocation5], %s53
    %v55 = vld [vmem:[%s54] sm:$0x1]
    %v56 = vadd.f32 %v51, %v55
    %s57 = sadd.s32 %s48, 2
    %s58 = sld [smem:[#allocation4 + %s57]]
    %s59 = scalar_lea.vmem [#allocation5], %s58
    %v60 = vld [vmem:[%s59] sm:$0x1]
    %v61 = vadd.f32 %v56, %v60
    %s62 = sadd.s32 %s48, 3
    %s63 = sld [smem:[#allocation4 + %s62]]
    %s64 = scalar_lea.vmem [#allocation5], %s63
    %v65 = vld [vmem:[%s64] sm:$0x1]
    %v66 = vadd.f32 %v61, %v65
    %s67 = sadd.s32 %s48, 4
    %s68 = sld [smem:[#allocation4 + %s67]]
    %s69 = scalar_lea.vmem [#allocation5], %s68
    %v70 = vld [vmem:[%s69] sm:$0x1]
    %v71 = vadd.f32 %v66, %v70
    %s72 = sadd.s32 %s48, 5
    %s73 = sld [smem:[#allocation4 + %s72]]
    %s74 = scalar_lea.vmem [#allocation5], %s73
    %v75 = vld [vmem:[%s74] sm:$0x1]
    %v76 = vadd.f32 %v71, %v75
    %s77 = sadd.s32 %s48, 6
    %s78 = sld [smem:[#allocation4 + %s77]]
    %s79 = scalar_lea.vmem [#allocation5], %s78
    %v80 = vld [vmem:[%s79] sm:$0x1]
    %v81 = vadd.f32 %v76, %v80
    %s82 = sadd.s32 %s48, 7
    %s83 = sld [smem:[#allocation4 + %s82]]
    %s84 = scalar_lea.vmem [#allocation5], %s83
    %v85 = vld [vmem:[%s84] sm:$0x1]
    %v86 = vadd.f32 %v81, %v85
    %v87 = vmul.f32 %v86, 0.125
    %88 = vst [vmem:[#allocation2] sm:$0x1] %v87
    %s89 = sadd.s32 %s48, 8
    %s90 = sld [smem:[#allocation4 + %s89]]
    %s91 = scalar_lea.vmem [#allocation5], %s90
    %v92 = vld [vmem:[%s91] sm:$0x1]
    %s93 = sadd.s32 %s48, 9
    %s94 = sld [smem:[#allocation4 + %s93]]
    %s95 = scalar_lea.vmem [#allocation5], %s94
    %v96 = vld [vmem:[%s95] sm:$0x1]
    %v97 = vadd.f32 %v92, %v96
    %s98 = sadd.s32 %s48, 10
    %s99 = sld [smem:[#allocation4 + %s98]]
    %s100 = scalar_lea.vmem [#allocation5], %s99
    %v101 = vld [vmem:[%s100] sm:$0x1]
    %v102 = vadd.f32 %v97, %v101
    %s103 = sadd.s32 %s48, 11
    %s104 = sld [smem:[#allocation4 + %s103]]
    %s105 = scalar_lea.vmem [#allocation5], %s104
    %v106 = vld [vmem:[%s105] sm:$0x1]
    %v107 = vadd.f32 %v102, %v106
    %s108 = sadd.s32 %s48, 12
    %s109 = sld [smem:[#allocation4 + %s108]]
    %s110 = scalar_lea.vmem [#allocation5], %s109
    %v111 = vld [vmem:[%s110] sm:$0x1]
    %v112 = vadd.f32 %v107, %v111
    %s113 = sadd.s32 %s48, 13
    %s114 = sld [smem:[#allocation4 + %s113]]
    %s115 = scalar_lea.vmem [#allocation5], %s114
    %v116 = vld [vmem:[%s115] sm:$0x1]
    %v117 = vadd.f32 %v112, %v116
    %s118 = sadd.s32 %s48, 14
    %s119 = sld [smem:[#allocation4 + %s118]]
    %s120 = scalar_lea.vmem [#allocation5], %s119
    %v121 = vld [vmem:[%s120] sm:$0x1]
    %v122 = vadd.f32 %v117, %v121
    %s123 = sadd.s32 %s48, 15
    %s124 = sld [smem:[#allocation4 + %s123]]
    %s125 = scalar_lea.vmem [#allocation5], %s124
    %v126 = vld [vmem:[%s125] sm:$0x1]
    %v127 = vadd.f32 %v122, %v126
    %v128 = vmul.f32 %v127, 0.125
    %129 = vst [vmem:[#allocation2 + $0x1] sm:$0x1] %v128
    %s130 = sadd.s32 %s48, 16
    %s131 = sld [smem:[#allocation4 + %s130]]
    %s132 = scalar_lea.vmem [#allocation5], %s131
    %v133 = vld [vmem:[%s132] sm:$0x1]
    %s134 = sadd.s32 %s48, 17
    %s135 = sld [smem:[#allocation4 + %s134]]
    %s136 = scalar_lea.vmem [#allocation5], %s135
    %v137 = vld [vmem:[%s136] sm:$0x1]
    %v138 = vadd.f32 %v133, %v137
    %s139 = sadd.s32 %s48, 18
    %s140 = sld [smem:[#allocation4 + %s139]]
    %s141 = scalar_lea.vmem [#allocation5], %s140
    %v142 = vld [vmem:[%s141] sm:$0x1]
    %v143 = vadd.f32 %v138, %v142
    %s144 = sadd.s32 %s48, 19
    %s145 = sld [smem:[#allocation4 + %s144]]
    %s146 = scalar_lea.vmem [#allocation5], %s145
    %v147 = vld [vmem:[%s146] sm:$0x1]
    %v148 = vadd.f32 %v143, %v147
    %s149 = sadd.s32 %s48, 20
    %s150 = sld [smem:[#allocation4 + %s149]]
    %s151 = scalar_lea.vmem [#allocation5], %s150
    %v152 = vld [vmem:[%s151] sm:$0x1]
    %v153 = vadd.f32 %v148, %v152
    %s154 = sadd.s32 %s48, 21
    %s155 = sld [smem:[#allocation4 + %s154]]
    %s156 = scalar_lea.vmem [#allocation5], %s155
    %v157 = vld [vmem:[%s156] sm:$0x1]
    %v158 = vadd.f32 %v153, %v157
    %s159 = sadd.s32 %s48, 22
    %s160 = sld [smem:[#allocation4 + %s159]]
    %s161 = scalar_lea.vmem [#allocation5], %s160
    %v162 = vld [vmem:[%s161] sm:$0x1]
    %v163 = vadd.f32 %v158, %v162
    %s164 = sadd.s32 %s48, 23
    %s165 = sld [smem:[#allocation4 + %s164]]
    %s166 = scalar_lea.vmem [#allocation5], %s165
    %v167 = vld [vmem:[%s166] sm:$0x1]
    %v168 = vadd.f32 %v163, %v167
    %v169 = vmul.f32 %v168, 0.125
    %170 = vst [vmem:[#allocation2 + $0x2] sm:$0x1] %v169
    %s171 = sadd.s32 %s48, 24
    %s172 = sld [smem:[#allocation4 + %s171]]
    %s173 = scalar_lea.vmem [#allocation5], %s172
    %v174 = vld [vmem:[%s173] sm:$0x1]
    %s175 = sadd.s32 %s48, 25
    %s176 = sld [smem:[#allocation4 + %s175]]
    %s177 = scalar_lea.vmem [#allocation5], %s176
    %v178 = vld [vmem:[%s177] sm:$0x1]
    %v179 = vadd.f32 %v174, %v178
    %s180 = sadd.s32 %s48, 26
    %s181 = sld [smem:[#allocation4 + %s180]]
    %s182 = scalar_lea.vmem [#allocation5], %s181
    %v183 = vld [vmem:[%s182] sm:$0x1]
    %v184 = vadd.f32 %v179, %v183
    %s185 = sadd.s32 %s48, 27
    %s186 = sld [smem:[#allocation4 + %s185]]
    %s187 = scalar_lea.vmem [#allocation5], %s186
    %v188 = vld [vmem:[%s187] sm:$0x1]
    %v189 = vadd.f32 %v184, %v188
    %s190 = sadd.s32 %s48, 28
    %s191 = sld [smem:[#allocation4 + %s190]]
    %s192 = scalar_lea.vmem [#allocation5], %s191
    %v193 = vld [vmem:[%s192] sm:$0x1]
    %v194 = vadd.f32 %v189, %v193
    %s195 = sadd.s32 %s48, 29
    %s196 = sld [smem:[#allocation4 + %s195]]
    %s197 = scalar_lea.vmem [#allocation5], %s196
    %v198 = vld [vmem:[%s197] sm:$0x1]
    %v199 = vadd.f32 %v194, %v198
    %s200 = sadd.s32 %s48, 30
    %s201 = sld [smem:[#allocation4 + %s200]]
    %s202 = scalar_lea.vmem [#allocation5], %s201
    %v203 = vld [vmem:[%s202] sm:$0x1]
    %v204 = vadd.f32 %v199, %v203
    %s205 = sadd.s32 %s48, 31
    %s206 = sld [smem:[#allocation4 + %s205]]
    %s207 = scalar_lea.vmem [#allocation5], %s206
    %v208 = vld [vmem:[%s207] sm:$0x1]
    %v209 = vadd.f32 %v204, %v208
    %v210 = vmul.f32 %v209, 0.125
    %211 = vst [vmem:[#allocation2 + $0x3] sm:$0x1] %v210
    %s212 = sadd.s32 %s48, 32
    %s213 = sld [smem:[#allocation4 + %s212]]
    %s214 = scalar_lea.vmem [#allocation5], %s213
    %v215 = vld [vmem:[%s214] sm:$0x1]
    %s216 = sadd.s32 %s48, 33
    %s217 = sld [smem:[#allocation4 + %s216]]
    %s218 = scalar_lea.vmem [#allocation5], %s217
    %v219 = vld [vmem:[%s218] sm:$0x1]
    %v220 = vadd.f32 %v215, %v219
    %s221 = sadd.s32 %s48, 34
    %s222 = sld [smem:[#allocation4 + %s221]]
    %s223 = scalar_lea.vmem [#allocation5], %s222
    %v224 = vld [vmem:[%s223] sm:$0x1]
    %v225 = vadd.f32 %v220, %v224
    %s226 = sadd.s32 %s48, 35
    %s227 = sld [smem:[#allocation4 + %s226]]
    %s228 = scalar_lea.vmem [#allocation5], %s227
    %v229 = vld [vmem:[%s228] sm:$0x1]
    %v230 = vadd.f32 %v225, %v229
    %s231 = sadd.s32 %s48, 36
    %s232 = sld [smem:[#allocation4 + %s231]]
    %s233 = scalar_lea.vmem [#allocation5], %s232
    %v234 = vld [vmem:[%s233] sm:$0x1]
    %v235 = vadd.f32 %v230, %v234
    %s236 = sadd.s32 %s48, 37
    %s237 = sld [smem:[#allocation4 + %s236]]
    %s238 = scalar_lea.vmem [#allocation5], %s237
    %v239 = vld [vmem:[%s238] sm:$0x1]
    %v240 = vadd.f32 %v235, %v239
    %s241 = sadd.s32 %s48, 38
    %s242 = sld [smem:[#allocation4 + %s241]]
    %s243 = scalar_lea.vmem [#allocation5], %s242
    %v244 = vld [vmem:[%s243] sm:$0x1]
    %v245 = vadd.f32 %v240, %v244
    %s246 = sadd.s32 %s48, 39
    %s247 = sld [smem:[#allocation4 + %s246]]
    %s248 = scalar_lea.vmem [#allocation5], %s247
    %v249 = vld [vmem:[%s248] sm:$0x1]
    %v250 = vadd.f32 %v245, %v249
    %v251 = vmul.f32 %v250, 0.125
    %252 = vst [vmem:[#allocation2 + $0x4] sm:$0x1] %v251
    %s253 = sadd.s32 %s48, 40
    %s254 = sld [smem:[#allocation4 + %s253]]
    %s255 = scalar_lea.vmem [#allocation5], %s254
    %v256 = vld [vmem:[%s255] sm:$0x1]
    %s257 = sadd.s32 %s48, 41
    %s258 = sld [smem:[#allocation4 + %s257]]
    %s259 = scalar_lea.vmem [#allocation5], %s258
    %v260 = vld [vmem:[%s259] sm:$0x1]
    %v261 = vadd.f32 %v256, %v260
    %s262 = sadd.s32 %s48, 42
    %s263 = sld [smem:[#allocation4 + %s262]]
    %s264 = scalar_lea.vmem [#allocation5], %s263
    %v265 = vld [vmem:[%s264] sm:$0x1]
    %v266 = vadd.f32 %v261, %v265
    %s267 = sadd.s32 %s48, 43
    %s268 = sld [smem:[#allocation4 + %s267]]
    %s269 = scalar_lea.vmem [#allocation5], %s268
    %v270 = vld [vmem:[%s269] sm:$0x1]
    %v271 = vadd.f32 %v266, %v270
    %s272 = sadd.s32 %s48, 44
    %s273 = sld [smem:[#allocation4 + %s272]]
    %s274 = scalar_lea.vmem [#allocation5], %s273
    %v275 = vld [vmem:[%s274] sm:$0x1]
    %v276 = vadd.f32 %v271, %v275
    %s277 = sadd.s32 %s48, 45
    %s278 = sld [smem:[#allocation4 + %s277]]
    %s279 = scalar_lea.vmem [#allocation5], %s278
    %v280 = vld [vmem:[%s279] sm:$0x1]
    %v281 = vadd.f32 %v276, %v280
    %s282 = sadd.s32 %s48, 46
    %s283 = sld [smem:[#allocation4 + %s282]]
    %s284 = scalar_lea.vmem [#allocation5], %s283
    %v285 = vld [vmem:[%s284] sm:$0x1]
    %v286 = vadd.f32 %v281, %v285
    %s287 = sadd.s32 %s48, 47
    %s288 = sld [smem:[#allocation4 + %s287]]
    %s289 = scalar_lea.vmem [#allocation5], %s288
    %v290 = vld [vmem:[%s289] sm:$0x1]
    %v291 = vadd.f32 %v286, %v290
    %v292 = vmul.f32 %v291, 0.125
    %293 = vst [vmem:[#allocation2 + $0x5] sm:$0x1] %v292
    %s294 = sadd.s32 %s48, 48
    %s295 = sld [smem:[#allocation4 + %s294]]
    %s296 = scalar_lea.vmem [#allocation5], %s295
    %v297 = vld [vmem:[%s296] sm:$0x1]
    %s298 = sadd.s32 %s48, 49
    %s299 = sld [smem:[#allocation4 + %s298]]
    %s300 = scalar_lea.vmem [#allocation5], %s299
    %v301 = vld [vmem:[%s300] sm:$0x1]
    %v302 = vadd.f32 %v297, %v301
    %s303 = sadd.s32 %s48, 50
    %s304 = sld [smem:[#allocation4 + %s303]]
    %s305 = scalar_lea.vmem [#allocation5], %s304
    %v306 = vld [vmem:[%s305] sm:$0x1]
    %v307 = vadd.f32 %v302, %v306
    %s308 = sadd.s32 %s48, 51
    %s309 = sld [smem:[#allocation4 + %s308]]
    %s310 = scalar_lea.vmem [#allocation5], %s309
    %v311 = vld [vmem:[%s310] sm:$0x1]
    %v312 = vadd.f32 %v307, %v311
    %s313 = sadd.s32 %s48, 52
    %s314 = sld [smem:[#allocation4 + %s313]]
    %s315 = scalar_lea.vmem [#allocation5], %s314
    %v316 = vld [vmem:[%s315] sm:$0x1]
    %v317 = vadd.f32 %v312, %v316
    %s318 = sadd.s32 %s48, 53
    %s319 = sld [smem:[#allocation4 + %s318]]
    %s320 = scalar_lea.vmem [#allocation5], %s319
    %v321 = vld [vmem:[%s320] sm:$0x1]
    %v322 = vadd.f32 %v317, %v321
    %s323 = sadd.s32 %s48, 54
    %s324 = sld [smem:[#allocation4 + %s323]]
    %s325 = scalar_lea.vmem [#allocation5], %s324
    %v326 = vld [vmem:[%s325] sm:$0x1]
    %v327 = vadd.f32 %v322, %v326
    %s328 = sadd.s32 %s48, 55
    %s329 = sld [smem:[#allocation4 + %s328]]
    %s330 = scalar_lea.vmem [#allocation5], %s329
    %v331 = vld [vmem:[%s330] sm:$0x1]
    %v332 = vadd.f32 %v327, %v331
    %v333 = vmul.f32 %v332, 0.125
    %334 = vst [vmem:[#allocation2 + $0x6] sm:$0x1] %v333
    %s335 = sadd.s32 %s48, 56
    %s336 = sld [smem:[#allocation4 + %s335]]
    %s337 = scalar_lea.vmem [#allocation5], %s336
    %v338 = vld [vmem:[%s337] sm:$0x1]
    %s339 = sadd.s32 %s48, 57
    %s340 = sld [smem:[#allocation4 + %s339]]
    %s341 = scalar_lea.vmem [#allocation5], %s340
    %v342 = vld [vmem:[%s341] sm:$0x1]
    %v343 = vadd.f32 %v338, %v342
    %s344 = sadd.s32 %s48, 58
    %s345 = sld [smem:[#allocation4 + %s344]]
    %s346 = scalar_lea.vmem [#allocation5], %s345
    %v347 = vld [vmem:[%s346] sm:$0x1]
    %v348 = vadd.f32 %v343, %v347
    %s349 = sadd.s32 %s48, 59
    %s350 = sld [smem:[#allocation4 + %s349]]
    %s351 = scalar_lea.vmem [#allocation5], %s350
    %v352 = vld [vmem:[%s351] sm:$0x1]
    %v353 = vadd.f32 %v348, %v352
    %s354 = sadd.s32 %s48, 60
    %s355 = sld [smem:[#allocation4 + %s354]]
    %s356 = scalar_lea.vmem [#allocation5], %s355
    %v357 = vld [vmem:[%s356] sm:$0x1]
    %v358 = vadd.f32 %v353, %v357
    %s359 = sadd.s32 %s48, 61
    %s360 = sld [smem:[#allocation4 + %s359]]
    %s361 = scalar_lea.vmem [#allocation5], %s360
    %v362 = vld [vmem:[%s361] sm:$0x1]
    %v363 = vadd.f32 %v358, %v362
    %s364 = sadd.s32 %s48, 62
    %s365 = sld [smem:[#allocation4 + %s364]]
    %s366 = scalar_lea.vmem [#allocation5], %s365
    %v367 = vld [vmem:[%s366] sm:$0x1]
    %v368 = vadd.f32 %v363, %v367
    %s369 = sadd.s32 %s48, 63
    %s370 = sld [smem:[#allocation4 + %s369]]
    %s371 = scalar_lea.vmem [#allocation5], %s370
    %v372 = vld [vmem:[%s371] sm:$0x1]
    %v373 = vadd.f32 %v368, %v372
    %v374 = vmul.f32 %v373, 0.125
    %375 = vst [vmem:[#allocation2 + $0x7] sm:$0x1] %v374
    %v376 = vld [vmem:[#allocation2] sm:$0xff]
    %v377 = vld [vmem:[#allocation8] sm:$0xff]
    %v378 = vld [vmem:[#allocation8 + $0x8] sm:$0xff]
    %v379 = vld [vmem:[#allocation8 + $0x10] sm:$0xff]
    %v380 = vld [vmem:[#allocation8 + $0x18] sm:$0xff]
    %v381 = vld [vmem:[#allocation8 + $0x20] sm:$0xff]
    %v382 = vld [vmem:[#allocation8 + $0x28] sm:$0xff]
    %v383 = vld [vmem:[#allocation8 + $0x30] sm:$0xff]
    %v384 = vld [vmem:[#allocation8 + $0x38] sm:$0xff]
    %v385 = vld [vmem:[#allocation8 + $0x40] sm:$0xff]
    %v386 = vld [vmem:[#allocation8 + $0x48] sm:$0xff]
    %v387 = vld [vmem:[#allocation8 + $0x50] sm:$0xff]
    %v388 = vld [vmem:[#allocation8 + $0x58] sm:$0xff]
    %v389 = vld [vmem:[#allocation8 + $0x60] sm:$0xff]
    %v390 = vld [vmem:[#allocation8 + $0x68] sm:$0xff]
    %v391 = vld [vmem:[#allocation8 + $0x70] sm:$0xff]
    %v392 = vld [vmem:[#allocation8 + $0x78] sm:$0xff]
    %v393 = vld [vmem:[%s3] sm:$0x1]
    %v395 = vlaneseq
    %v396 = vshrl.u32 %v395, 7
    %v397 = vsub.s32 0, %v396
    %v398 = vrot.slane %v393, %v397
    %400 = vmatprep.subr.mxu0 0.0
    %401 = vmatpush1.msra.mxu0 %v392
    %402 = vmatprep.subr.mxu0 0.0
    %403 = vmatpush1.msra.mxu0 %v391
    %404 = vmatprep.subr.mxu0 0.0
    %405 = vmatpush1.msra.mxu0 %v390
    %406 = vmatprep.subr.mxu0 0.0
    %407 = vmatpush1.msra.mxu0 %v389
    %408 = vmatprep.subr.mxu0 0.0
    %409 = vmatpush1.msra.mxu0 %v388
    %410 = vmatprep.subr.mxu0 0.0
    %411 = vmatpush1.msra.mxu0 %v387
    %412 = vmatprep.subr.mxu0 0.0
    %413 = vmatpush1.msra.mxu0 %v386
    %414 = vmatprep.subr.mxu0 0.0
    %415 = vmatpush1.msra.mxu0 %v385
    %416 = vmatprep.subr.mxu0 0.0
    %417 = vmatpush1.msra.mxu0 %v384
    %418 = vmatprep.subr.mxu0 0.0
    %419 = vmatpush1.msra.mxu0 %v383
    %420 = vmatprep.subr.mxu0 0.0
    %421 = vmatpush1.msra.mxu0 %v382
    %422 = vmatprep.subr.mxu0 0.0
    %423 = vmatpush1.msra.mxu0 %v381
    %424 = vmatprep.subr.mxu0 0.0
    %425 = vmatpush1.msra.mxu0 %v380
    %426 = vmatprep.subr.mxu0 0.0
    %427 = vmatpush1.msra.mxu0 %v379
    %428 = vmatprep.subr.mxu0 0.0
    %429 = vmatpush1.msra.mxu0 %v378
    %430 = vmatprep.subr.mxu0 0.0
    %431 = vmatpush1.msra.mxu0 %v377
    %432 = vmatprep.subr.mxu0 0.0
    %433 = vmatpush2.msra.mxu0 0.0
    %434 = vmatprep.subr.mxu0 0.0
    %435 = vmatpush2.msra.mxu0 0.0
    %436 = vmatprep.subr.mxu0 0.0
    %437 = vmatpush2.msra.mxu0 0.0
    %438 = vmatprep.subr.mxu0 0.0
    %439 = vmatpush2.msra.mxu0 0.0
    %440 = vmatprep.subr.mxu0 0.0
    %441 = vmatpush2.msra.mxu0 0.0
    %442 = vmatprep.subr.mxu0 0.0
    %443 = vmatpush2.msra.mxu0 0.0
    %444 = vmatprep.subr.mxu0 0.0
    %445 = vmatpush2.msra.mxu0 0.0
    %446 = vmatprep.subr.mxu0 0.0
    %447 = vmatpush2.msra.mxu0 0.0
    %448 = vmatprep.subr.mxu0 0.0
    %449 = vmatpush2.msra.mxu0 0.0
    %450 = vmatprep.subr.mxu0 0.0
    %451 = vmatpush2.msra.mxu0 0.0
    %452 = vmatprep.subr.mxu0 0.0
    %453 = vmatpush2.msra.mxu0 0.0
    %454 = vmatprep.subr.mxu0 0.0
    %455 = vmatpush2.msra.mxu0 0.0
    %456 = vmatprep.subr.mxu0 0.0
    %457 = vmatpush2.msra.mxu0 0.0
    %458 = vmatprep.subr.mxu0 0.0
    %459 = vmatpush2.msra.mxu0 0.0
    %460 = vmatprep.subr.mxu0 0.0
    %461 = vmatpush2.msra.mxu0 0.0
    %462 = vmatprep.subr.mxu0 0.0
    %463 = vmatpush2.msra.mxu0 0.0
    %464 = vmatprep.mubr.f32.mxu0 0.0
    %465 = vmatmul.mubr.f32.gmra.mxu0 %v376
    %v466 = vpop.f32.mrf.mxu0
    %v467 = vadd.f32 %v398, %v466
    %v468 = vpop.f32.mrf.mxu0
    %469 = vdwg.mxu0
    %470 = vst [vmem:[#allocation10] sm:$0xff] %v467
    // Predicated region
    $region22: #{tpu_custom_call.1} parent=1 // pred_check
      _
    $region23: #{tpu_custom_call.1} parent=1 // pred_check_branch
      %472 = sbr.rel (0) target = $region25
    $region24: #{tpu_custom_call.1} parent=1 // pred_region
      %s474 = ssub.s32 128, 128
      %475 = vsyncadd [#allocation7], %s474
      %s477 = sshll.u32 [#allocation10], 4
      %s478 = int_to_ptr.vmem [resolvable:$true] %s477
      %480 = dma.vmem_to_hbm [thread:$0]  %s478, 128, %s4, [#allocation7]
    $region25: #{tpu_custom_call.1} parent=1 // pred_fallthru
      _
    // Predicated region
    $region26: #{tpu_custom_call.1} parent=1 // pred_check
      _
    $region27: #{tpu_custom_call.1} parent=1 // pred_check_branch
      %482 = sbr.rel (0) target = $region29
    $region28: #{tpu_custom_call.1} parent=1 // pred_region
      %483 = dma.done [#allocation7], 128
    $region29: #{tpu_custom_call.1} parent=1 // pred_fallthru
      _
    %484 = vsyncpa [#allocation6], 1
    %485 = vsyncpa [#allocation9], 1
    %486 = vsyncpa [#allocation7], 1

</llo_original>
